<compile_context>
chip_gen: v7x
topology: tpu7x:2x2x1
jax: 0.10.0
libtpu: 0.0.40
codegen_flags: <defaults>
</compile_context>

<pallas_src>
import jax
import jax.numpy as jnp
from jax.experimental import pallas as pl
from jax.experimental.pallas import tpu as pltpu


def _round_up(x, m):
    return ((x + m - 1) // m) * m


# One grid step = one (dst ntype, m tile, k tile).
#   nkb_ref: [NT] int32 SMEM   number of real K blocks for each dst ntype
#   a_ref:   [tm, tk]   bf16   degree-normalized A^T tile (mean folded in)
#   e_ref:   [tk, D_pad] bf16  K-stacked source embedding tile for this ntype
#   b_ref:   [1, D_pad] f32    h_bias (broadcast over rows)
#   o_ref:   [tm, D_pad] bf16  relu( sum_k A_norm^T @ E + bias )
#   acc_ref: [tm, D_pad] f32   VMEM accumulator across the K (reduction) axis
def _rgcn_embed_kernel(nkb_ref, a_ref, e_ref, b_ref, o_ref, acc_ref):
    n = pl.program_id(0)
    k = pl.program_id(2)

    @pl.when(k == 0)
    def _():
        acc_ref[...] = jnp.zeros_like(acc_ref)

    # Skip pad-only K blocks of this ntype (their DMA is also avoided by the
    # clamped index_map: the block index repeats, so Pallas does not re-fetch).
    @pl.when(k < nkb_ref[n])
    def _():
        acc_ref[...] += jnp.dot(a_ref[...], e_ref[...],
                                preferred_element_type=jnp.float32)

    @pl.when(k == pl.num_programs(2) - 1)
    def _():
        # bias add + ReLU; dropout(p=0.0) is identity. Emit bf16 output.
        o_ref[...] = jnp.maximum(acc_ref[...] + b_ref[...], 0.0).astype(o_ref.dtype)


def precompute_graph(num_nodes, canonical_etypes, adj, embed_size, tm=512, tk=512):
    """Static-graph preprocessing, done ONCE and cached across forward calls.

    Folds the per-etype mean (1/in_degree) into the adjacency in f32, transposes,
    concatenates each dst ntype's etype blocks along the contraction dim K and
    batches into a single padded bf16 slab.  Also records the K layout used to
    pack the embedding tables and the per-ntype count of real K tiles.
    """
    ntypes = list(num_nodes)
    slots = {nt: [ce for ce in canonical_etypes if ce[2] == nt] for nt in ntypes}

    M_raw = max(num_nodes[nt] for nt in ntypes)
    tm_eff = _round_up(min(tm, _round_up(M_raw, 16)), 16)    # bf16: 2 rows/sublane
    M_pad = _round_up(M_raw, tm_eff)

    k_tot = {nt: sum(num_nodes[ce[0]] for ce in slots[nt]) for nt in ntypes}
    K_raw = max(1, max(k_tot.values()))
    tk_eff = _round_up(min(tk, _round_up(K_raw, 128)), 128)  # lane / MXU friendly
    K_pad = _round_up(K_raw, tk_eff)

    D_pad = _round_up(max(embed_size, 128), 128)             # lane-dense output

    a_rows = []
    for nt in ntypes:
        if slots[nt]:
            blocks = []
            for (src, e, dst) in slots[nt]:
                A = adj[(src, e, dst)].astype(jnp.float32)   # [n_src, n_dst] of {0,1}
                deg = A.sum(axis=0)                          # in-degree per dst node
                # fn.mean folded here, in f32; single bf16 cast below.
                blocks.append((A / jnp.maximum(deg, 1.0)[None, :]).T)
            cat = jnp.concatenate(blocks, axis=1)            # [n_dst, k_tot[nt]]
        else:
            cat = jnp.zeros((num_nodes[nt], 1), jnp.float32)
        cat = jnp.pad(cat, ((0, M_pad - cat.shape[0]), (0, K_pad - cat.shape[1])))
        a_rows.append(cat)
    a_b = jnp.stack(a_rows).astype(jnp.bfloat16)             # [NT, M_pad, K_pad]
    # TODO(synk): on v7x the 0/1-structured adjacency could be stored in fp8
    # (e4m3) to halve its DMA/VMEM footprint (keep a separate f32 invdeg then).

    nkb = jnp.array([max(1, -(-k_tot[nt] // tk_eff)) for nt in ntypes], jnp.int32)

    return dict(ntypes=ntypes, slots=slots, num_nodes=dict(num_nodes),
                embed_size=embed_size, tm=tm_eff, tk=tk_eff,
                M_pad=M_pad, K_pad=K_pad, D_pad=D_pad, a_b=a_b, nkb=nkb)


def pack_embeds(cache, embeds):
    """Pack the trainable per-etype embedding tables into the padded bf16 slab
    [NT, K_pad, D_pad] the kernel consumes.  Run once (and again only when the
    parameters change, e.g. after an optimizer step) -- NOT per forward."""
    K_pad, D_pad, D = cache["K_pad"], cache["D_pad"], cache["embed_size"]
    rows = []
    for nt in cache["ntypes"]:
        segs = [embeds[ce] for ce in cache["slots"][nt]]
        cat = (jnp.concatenate(segs, axis=0) if segs
               else jnp.zeros((1, D), jnp.float32))
        cat = jnp.pad(cat, ((0, K_pad - cat.shape[0]), (0, D_pad - D)))
        rows.append(cat)
    return jnp.stack(rows).astype(jnp.bfloat16)              # [NT, K_pad, D_pad]


def pack_bias(cache, h_bias):
    D_pad, D = cache["D_pad"], cache["embed_size"]
    return jnp.pad(h_bias, (0, D_pad - D)).reshape(1, D_pad).astype(jnp.float32)


def rgcn_hetero_embed_forward(cache, e_packed, bias_packed):
    """One fused kernel launch covering every dst ntype, every incident etype
    and every (m, k) tile.  Returns per-ntype node features (bf16), same order
    as the num_nodes keys."""
    ntypes = cache["ntypes"]
    NT = len(ntypes)
    tm, tk = cache["tm"], cache["tk"]
    M_pad, K_pad, D_pad = cache["M_pad"], cache["K_pad"], cache["D_pad"]
    a_b, nkb = cache["a_b"], cache["nkb"]

    m_blocks = M_pad // tm
    k_blocks = K_pad // tk

    def clamp_k(k, n, nkb_ref):
        # Pad-only K blocks map to the last real block -> no redundant DMA;
        # the kernel's pl.when skips their matmul.
        return jnp.minimum(k, jnp.maximum(nkb_ref[n] - 1, 0))

    a_spec = pl.BlockSpec((None, tm, tk),
                          lambda n, m, k, nkb_ref: (n, m, clamp_k(k, n, nkb_ref)))
    e_spec = pl.BlockSpec((None, tk, D_pad),
                          lambda n, m, k, nkb_ref: (n, clamp_k(k, n, nkb_ref), 0))
    b_spec = pl.BlockSpec((1, D_pad), lambda n, m, k, nkb_ref: (0, 0))
    o_spec = pl.BlockSpec((None, tm, D_pad), lambda n, m, k, nkb_ref: (n, m, 0))

    flops = 2 * NT * M_pad * K_pad * D_pad
    bytes_accessed = (a_b.size * 2 + e_packed.size * 2
                      + bias_packed.size * 4 + NT * M_pad * D_pad * 2)

    out = pl.pallas_call(
        _rgcn_embed_kernel,
        out_shape=jax.ShapeDtypeStruct((NT, M_pad, D_pad), jnp.bfloat16),
        grid_spec=pltpu.PrefetchScalarGridSpec(
            num_scalar_prefetch=1,
            grid=(NT, m_blocks, k_blocks),          # reduction (k) innermost
            in_specs=[a_spec, e_spec, b_spec],
            out_specs=o_spec,
            scratch_shapes=[pltpu.VMEM((tm, D_pad), jnp.float32)],
        ),
        compiler_params=pltpu.CompilerParams(
            dimension_semantics=("parallel", "parallel", "arbitrary")),
        cost_estimate=pl.CostEstimate(flops=flops, transcendentals=0,
                                      bytes_accessed=bytes_accessed),
    )(nkb, a_b, e_packed, bias_packed)

    nn_ = cache["num_nodes"]
    D = cache["embed_size"]
    # Slice padding off per ntype.
    # TODO(synk): self_loop=False (module default) -> self_embeds add omitted.
    return [out[i, :nn_[nt], :D] for i, nt in enumerate(ntypes)]


def xavier_uniform(key, shape, gain):
    # PyTorch xavier_uniform_ on a 2-D [fan_out, fan_in] tensor.
    fan_out, fan_in = shape
    bound = gain * (6.0 / (fan_in + fan_out)) ** 0.5
    return jax.random.uniform(key, shape, jnp.float32, -bound, bound)


if __name__ == "__main__":
    key = jax.random.PRNGKey(0)
    embed_size = 32
    num_nodes = {"user": 8, "item": 12, "tag": 6}
    canonical_etypes = [
        ("user", "follows", "user"),
        ("user", "buys", "item"),
        ("tag", "describes", "item"),
        ("item", "has", "tag"),
    ]

    # Deterministic synthetic graph (dense adjacency per etype) + parameters.
    gain = 2.0 ** 0.5  # nn.init.calculate_gain('relu')
    adj, embeds = {}, {}
    for ce in canonical_etypes:
        key, ka, ke = jax.random.split(key, 3)
        src, e, dst = ce
        adj[ce] = jax.random.bernoulli(
            ka, 0.4, (num_nodes[src], num_nodes[dst])).astype(jnp.float32)
        embeds[ce] = xavier_uniform(ke, (num_nodes[src], embed_size), gain)
    h_bias = jnp.zeros((embed_size,), jnp.float32)  # nn.init.zeros_

    # One-time (cached) static-graph preprocessing + parameter packing;
    # neither is part of the per-forward hot path.
    cache = precompute_graph(num_nodes, canonical_etypes, adj, embed_size)
    e_packed = pack_embeds(cache, embeds)
    bias_packed = pack_bias(cache, h_bias)

    hs = rgcn_hetero_embed_forward(cache, e_packed, bias_packed)
    hs = [jax.block_until_ready(h) for h in hs]

    # Pure-JAX f32 reference of the module's forward.
    refs = []
    for ntype in num_nodes:
        acc = jnp.zeros((num_nodes[ntype], embed_size), jnp.float32)
        for (src, e, dst) in canonical_etypes:
            if dst != ntype:
                continue
            A = adj[(src, e, dst)]
            deg = A.sum(axis=0)
            acc = acc + (A / jnp.maximum(deg, 1.0)[None, :]).T @ embeds[(src, e, dst)]
        refs.append(jnp.maximum(acc + h_bias[None, :], 0.0))

    # bf16 operands + bf16 output -> loosened tolerance (accumulation is f32).
    for h, r, ntype in zip(hs, refs, num_nodes):
        assert h.shape == (num_nodes[ntype], embed_size)
        assert jnp.allclose(h.astype(jnp.float32), r, atol=2e-2, rtol=2e-2), \
            f"mismatch for {ntype}"

    # TODO(synk): for genuinely sparse production graphs replace the dense
    # A^T @ E formulation with a CSR gather + segment-mean kernel (scalar-
    # prefetched edge tables in SMEM + manual DMA of source embedding rows).
    print("KERNEL_OK")
</pallas_src>

<mosaic_0001>
module attributes {stable_mosaic.version = 11 : i64} {
  func.func @_rgcn_embed_kernel(%arg0: i32, %arg1: i32, %arg2: i32, %arg3: memref<3xi32, #tpu.memory_space<smem>>, %arg4: memref<1x16x128xbf16, #tpu.memory_space<vmem>>, %arg5: memref<1x128x128xbf16, #tpu.memory_space<vmem>>, %arg6: memref<1x128xf32, #tpu.memory_space<vmem>>, %arg7: memref<1x16x128xbf16, #tpu.memory_space<vmem>>, %arg8: memref<16x128xf32, #tpu.memory_space<vmem>>) attributes {dimension_semantics = [#tpu.dimension_semantics<parallel>, #tpu.dimension_semantics<parallel>, #tpu.dimension_semantics<arbitrary>], iteration_bounds = array<i64: 3, 1, 1>, scalar_prefetch = 1 : i64, scratch_operands = 1 : i64, tpu.core_type = #tpu.core_type<tc>, window_params = [{transform_indices = @transform_0, window_bounds = array<i64: 1, 16, 128>}, {transform_indices = @transform_1, window_bounds = array<i64: 1, 128, 128>}, {pipeline_mode = #tpu.pipeline_mode<synchronous>, transform_indices = @transform_2, window_bounds = array<i64: 1, 128>}, {transform_indices = @transform_3, window_bounds = array<i64: 1, 16, 128>}]} {
    %c0_i32 = arith.constant 0 : i32
    %0 = arith.cmpi eq, %arg2, %c0_i32 : i32
    %1 = arith.extui %0 : i1 to i32
    %c0_i32_0 = arith.constant 0 : i32
    %2 = arith.cmpi ne, %1, %c0_i32_0 : i32
    scf.if %2 {
      %cst = arith.constant 0.000000e+00 : f32
      %11 = vector.broadcast %cst : f32 to vector<16x128xf32>
      %c0 = arith.constant 0 : index
      %c0_4 = arith.constant 0 : index
      %12 = vector.load %arg8[%c0, %c0_4] : memref<16x128xf32, #tpu.memory_space<vmem>>, vector<16x128xf32>
      tpu.vector_store %arg8[%c0, %c0_4], %11 {strides = array<i32>} : memref<16x128xf32, #tpu.memory_space<vmem>>, vector<16x128xf32>,
    } else {
    }
    %3 = arith.index_cast %arg0 : i32 to index
    %4 = memref.load %arg3[%3] : memref<3xi32, #tpu.memory_space<smem>>
    %5 = arith.cmpi slt, %arg2, %4 : i32
    %6 = arith.extui %5 : i1 to i32
    %c0_i32_1 = arith.constant 0 : i32
    %7 = arith.cmpi ne, %6, %c0_i32_1 : i32
    scf.if %7 {
      %c0 = arith.constant 0 : index
      %c0_4 = arith.constant 0 : index
      %11 = vector.load %arg8[%c0, %c0_4] : memref<16x128xf32, #tpu.memory_space<vmem>>, vector<16x128xf32>
      %c0_5 = arith.constant 0 : index
      %c0_6 = arith.constant 0 : index
      %c0_7 = arith.constant 0 : index
      %12 = vector.load %arg4[%c0_5, %c0_6, %c0_7] : memref<1x16x128xbf16, #tpu.memory_space<vmem>>, vector<1x16x128xbf16>
      %13 = vector.shape_cast %12 : vector<1x16x128xbf16> to vector<16x128xbf16>
      %c0_8 = arith.constant 0 : index
      %c0_9 = arith.constant 0 : index
      %c0_10 = arith.constant 0 : index
      %14 = vector.load %arg5[%c0_8, %c0_9, %c0_10] : memref<1x128x128xbf16, #tpu.memory_space<vmem>>, vector<1x128x128xbf16>
      %15 = vector.shape_cast %14 : vector<1x128x128xbf16> to vector<128x128xbf16>
      %cst = arith.constant dense<0.000000e+00> : vector<16x128xf32>
      %16 = tpu.matmul %13, %15, %cst {dimension_numbers = #tpu.dot_dimension_numbers<[1], [0], [0], [1], [0, 0, 1, 1], [], []>} : vector<16x128xbf16>, vector<128x128xbf16>, vector<16x128xf32> -> vector<16x128xf32>
      %17 = arith.addf %11, %16 : vector<16x128xf32>
      %c0_11 = arith.constant 0 : index
      %c0_12 = arith.constant 0 : index
      %18 = vector.load %arg8[%c0_11, %c0_12] : memref<16x128xf32, #tpu.memory_space<vmem>>, vector<16x128xf32>
      tpu.vector_store %arg8[%c0_11, %c0_12], %17 {strides = array<i32>} : memref<16x128xf32, #tpu.memory_space<vmem>>, vector<16x128xf32>,
    } else {
    }
    %c0_i32_2 = arith.constant 0 : i32
    %8 = arith.cmpi eq, %arg2, %c0_i32_2 : i32
    %9 = arith.extui %8 : i1 to i32
    %c0_i32_3 = arith.constant 0 : i32
    %10 = arith.cmpi ne, %9, %c0_i32_3 : i32
    scf.if %10 {
      %c0 = arith.constant 0 : index
      %c0_4 = arith.constant 0 : index
      %11 = vector.load %arg8[%c0, %c0_4] : memref<16x128xf32, #tpu.memory_space<vmem>>, vector<16x128xf32>
      %c0_5 = arith.constant 0 : index
      %c0_6 = arith.constant 0 : index
      %12 = vector.load %arg6[%c0_5, %c0_6] : memref<1x128xf32, #tpu.memory_space<vmem>>, vector<1x128xf32>
      %13 = vector.broadcast %12 : vector<1x128xf32> to vector<16x128xf32>
      %14 = arith.addf %11, %13 : vector<16x128xf32>
      %cst = arith.constant 0.000000e+00 : f32
      %15 = vector.broadcast %cst : f32 to vector<16x128xf32>
      %16 = arith.maximumf %14, %15 : vector<16x128xf32>
      %17 = arith.truncf %16 : vector<16x128xf32> to vector<16x128xbf16>
      %c0_7 = arith.constant 0 : index
      %c0_8 = arith.constant 0 : index
      %c0_9 = arith.constant 0 : index
      %18 = vector.load %arg7[%c0_7, %c0_8, %c0_9] : memref<1x16x128xbf16, #tpu.memory_space<vmem>>, vector<1x16x128xbf16>
      %19 = vector.shape_cast %18 : vector<1x16x128xbf16> to vector<16x128xbf16>
      %20 = vector.shape_cast %17 : vector<16x128xbf16> to vector<1x16x128xbf16>
      tpu.vector_store %arg7[%c0_7, %c0_8, %c0_9], %20 {strides = array<i32>} : memref<1x16x128xbf16, #tpu.memory_space<vmem>>, vector<1x16x128xbf16>,
    } else {
    }
    return
  }
  func.func @transform_0(%arg0: i32, %arg1: i32, %arg2: i32, %arg3: memref<3xi32, #tpu.memory_space<smem>>) -> (i32, i32, i32) {
    %0 = arith.index_cast %arg0 : i32 to index
    %1 = memref.load %arg3[%0] : memref<3xi32, #tpu.memory_space<smem>>
    %c1_i32 = arith.constant 1 : i32
    %2 = arith.subi %1, %c1_i32 : i32
    %c0_i32 = arith.constant 0 : i32
    %3 = arith.maxsi %2, %c0_i32 : i32
    %4 = arith.minsi %arg2, %3 : i32
    %c0_i32_0 = arith.constant 0 : i32
    return %arg0, %arg1, %4 : i32, i32, i32
  }
  func.func @transform_1(%arg0: i32, %arg1: i32, %arg2: i32, %arg3: memref<3xi32, #tpu.memory_space<smem>>) -> (i32, i32, i32) {
    %0 = arith.index_cast %arg0 : i32 to index
    %1 = memref.load %arg3[%0] : memref<3xi32, #tpu.memory_space<smem>>
    %c1_i32 = arith.constant 1 : i32
    %2 = arith.subi %1, %c1_i32 : i32
    %c0_i32 = arith.constant 0 : i32
    %3 = arith.maxsi %2, %c0_i32 : i32
    %4 = arith.minsi %arg2, %3 : i32
    %c0_i32_0 = arith.constant 0 : i32
    %c0_i32_1 = arith.constant 0 : i32
    return %arg0, %4, %c0_i32_0 : i32, i32, i32
  }
  func.func @transform_2(%arg0: i32, %arg1: i32, %arg2: i32, %arg3: memref<3xi32, #tpu.memory_space<smem>>) -> (i32, i32) {
    %c0_i32 = arith.constant 0 : i32
    %c0_i32_0 = arith.constant 0 : i32
    %c0_i32_1 = arith.constant 0 : i32
    return %c0_i32, %c0_i32_0 : i32, i32
  }
  func.func @transform_3(%arg0: i32, %arg1: i32, %arg2: i32, %arg3: memref<3xi32, #tpu.memory_space<smem>>) -> (i32, i32, i32) {
    %c0_i32 = arith.constant 0 : i32
    %c0_i32_0 = arith.constant 0 : i32
    return %arg0, %arg1, %c0_i32 : i32, i32, i32
  }
}

</mosaic_0001>

<llo_original>
// kernel: tpu_custom_call.1
$region0: #{tpu_custom_call.1}
  #allocation0 [shape = 'u32[]', space=smem, size = 0x4, offset = 0x4, fixed_abs, tag = 'smem constant byte address 0x4 - core index']
  #allocation1 [shape = 'u32[144,128]{1,0:T(1,128)}', space=vmem, size = 0x12000, scoped, tag = 'internal scratch']
  #allocation2 [shape = 'f32[16,128]{1,0:T(8,128)}', space=vmem, size = 0x2000, scoped, tag = 'scratch operand']
  #allocation3 [shape = 's32[1]{0}', space=sflag, size = 0x4, scoped, tag = 'scoped memory for tpu_custom_call.1']
  #allocation4 [shape = 'u8[512]{0}', space=smem, size = 0x200, scoped, tag = 'prefetched SMEM operand 0']
  %s0 = inlined_call_operand.hbm [shape: s32[3], index: 0, kind: input, shape index: {}]
  %s1 = inlined_call_operand.hbm [shape: bf16[3,16,128], index: 1, kind: input, shape index: {}]
  %s2 = inlined_call_operand.hbm [shape: bf16[3,128,128], index: 2, kind: input, shape index: {}]
  %s3 = inlined_call_operand.vmem [shape: f32[1,128], index: 3, kind: input, shape index: {}]
  %s4 = inlined_call_operand.hbm [shape: bf16[3,16,128], index: 4, kind: output, shape index: {}]
  %s5 = sld [smem:[#allocation0]]
  $region65: #{tpu_custom_call.1} parent=0
    _
  %s7 = ssub.s32 1, %s5
  %s8 = scalar_select 0, %s7, %s5
  %10 = dma.hbm_to_smem %s0, 16, [#allocation4], [#allocation3]
  %11 = dma.done [#allocation3], 16
  %12 = sfence
  $region1: #{tpu_custom_call.1} parent=0
    #allocation5 [shape = 'u8[8192]{0}', space=vmem, size = 0x2000, scoped, tag = 'input window, operand 1']
    #allocation6 [shape = 's32[2]{0}', space=sflag, size = 0x8, scoped, tag = 'scoped memory for tpu_custom_call.1']
    #allocation7 [shape = 's32[2]{0}', space=sflag, size = 0x8, scoped, tag = 'scoped memory for tpu_custom_call.1']
    #allocation8 [shape = 'u8[65536]{0}', space=vmem, size = 0x10000, scoped, tag = 'input window, operand 2']
    #allocation9 [shape = 's32[2]{0}', space=sflag, size = 0x8, scoped, tag = 'scoped memory for tpu_custom_call.1']
    #allocation10 [shape = 'u8[8192]{0}', space=vmem, size = 0x2000, scoped, tag = 'output window, operand 0']
    %13 = vsyncpa [#allocation6], 0
    %s14 = scalar_lea.sflag [#allocation6], 1
    %15 = vsyncpa %s14, 0
    %16 = vsyncpa [#allocation9], 0
    %s17 = scalar_lea.sflag [#allocation9], 1
    %18 = vsyncpa %s17, 0
    %19 = vsyncpa [#allocation7], 0
    %s20 = scalar_lea.sflag [#allocation7], 1
    %21 = vsyncpa %s20, 0
    loop: start=0, step=1, limit=5
    $region2: #{tpu_custom_call.1} parent=1 // loop_pre_header
      _
    $region3: #{tpu_custom_call.1} parent=1 // loop_header
      %s23 = sphi 0, %s27
      %p24 = scmp.ge.s32.totalorder %s23, 5
      %s30 = sphi 0, %s49
      %s31 = sphi 0, %s45
      %s32 = sphi 0, %s41
      %s33 = sphi 0, %s30
      %s34 = sphi 0, %s31
      %s35 = sphi 0, %s32
      %s36 = sphi 0, %s33
      %s37 = sphi 0, %s34
      %s38 = sphi 0, %s35
      %s68 = sphi 0, %s70
      %s71 = sphi 0, %s68
      %s72 = sphi 0, %s71
      %s88 = sphi 0, %s72
      %s108 = sphi 0, %s110
      %s111 = sphi 0, %s108
      %s112 = sphi 0, %s111
      %s128 = sphi 0, %s112
      %s132 = sphi 0, %s132
      %s134 = sphi 0, %s132
      %s135 = sphi 0, %s134
      %s149 = sphi 0, %s135
      %s157 = sphi 0, %s159
      %s160 = sphi 0, %s157
      %s161 = sphi 0, %s160
      %s177 = sphi 0, %s161
    $region4: #{tpu_custom_call.1} parent=1 // loop_header_branch
      %26 = sbr.rel (%p24) target = $region8
    $region5: #{tpu_custom_call.1} parent=1 // loop_body
      %s28 = ssub.s32 %s23, 1
      %s29 = ssub.s32 %s23, 2
      %s39 = sadd.s32 1, %s32
      %p40 = scmp.ge.s32.totalorder %s39, 1
      %s41 = scalar_select %p40, 0, %s39
      %s42 = sadd.s32 1, %s31
      %s43 = scalar_select %p40, %s42, %s31
      %p44 = scmp.ge.s32.totalorder %s43, 1
      %s45 = scalar_select %p44, 0, %s43
      %s46 = sadd.s32 1, %s30
      %s47 = scalar_select %p44, %s46, %s30
      %p48 = scmp.ge.s32.totalorder %s47, 3
      %s49 = scalar_select %p48, 0, %s47
      %s50 = sld [smem:[#allocation4 + %s30]]
      %s51 = ssub.s32 %s50, 1
      %p52 = scmp.gt.s32.totalorder %s51, 0
      %s53 = scalar_select %p52, %s51, 0
      %p54 = scmp.lt.s32.totalorder %s32, %s53
      %s55 = scalar_select %p54, %s32, %s53
      %s56 = sld [smem:[#allocation4 + %s49]]
      %s57 = ssub.s32 %s56, 1
      %p58 = scmp.gt.s32.totalorder %s57, 0
      %s59 = scalar_select %p58, %s57, 0
      %p60 = scmp.lt.s32.totalorder %s41, %s59
      %s61 = scalar_select %p60, %s41, %s59
      %s62 = ssub.s32 %s30, %s49
      %s63 = ssub.s32 %s31, %s45
      %s64 = sor.u32 %s62, %s63
      %s65 = ssub.s32 %s55, %s61
      %s66 = sor.u32 %s64, %s65
      %p67 = scmp.eq.s32.totalorder %s66, 0
      %s69 = sadd.s32 %s68, 1
      %s70 = scalar_select %p67, %s68, %s69
      %p73 = pneg %p67
      %p74 = scmp.eq.s32.totalorder %s23, 2
      %p75 = por %p73, %p74
      %p76 = scmp.ne.s32.totalorder %s68, %s71
      %p77 = scmp.eq.s32.totalorder %s23, 0
      %p78 = por %p76, %p77
      %p79 = scmp.ne.s32.totalorder %s68, %s71
      %p80 = scmp.eq.s32.totalorder %s28, 2
      %p81 = por %p79, %p80
      %p82 = scmp.ne.s32.totalorder %s71, %s72
      %p83 = scmp.eq.s32.totalorder %s28, 0
      %p84 = por %p82, %p83
      %p85 = scmp.ne.s32.totalorder %s71, %s72
      %p86 = scmp.eq.s32.totalorder %s29, 2
      %p87 = por %p85, %p86
      %p89 = scmp.ne.s32.totalorder %s72, %s88
      %p90 = scmp.eq.s32.totalorder %s29, 0
      %p91 = por %p89, %p90
      %s92 = sld [smem:[#allocation4 + %s30]]
      %s93 = ssub.s32 %s92, 1
      %p94 = scmp.gt.s32.totalorder %s93, 0
      %s95 = scalar_select %p94, %s93, 0
      %p96 = scmp.lt.s32.totalorder %s32, %s95
      %s97 = scalar_select %p96, %s32, %s95
      %s98 = sld [smem:[#allocation4 + %s49]]
      %s99 = ssub.s32 %s98, 1
      %p100 = scmp.gt.s32.totalorder %s99, 0
      %s101 = scalar_select %p100, %s99, 0
      %p102 = scmp.lt.s32.totalorder %s41, %s101
      %s103 = scalar_select %p102, %s41, %s101
      %s104 = ssub.s32 %s30, %s49
      %s105 = ssub.s32 %s97, %s103
      %s106 = sor.u32 %s104, %s105
      %p107 = scmp.eq.s32.totalorder %s106, 0
      %s109 = sadd.s32 %s108, 1
      %s110 = scalar_select %p107, %s108, %s109
      %p113 = pneg %p107
      %p114 = scmp.eq.s32.totalorder %s23, 2
      %p115 = por %p113, %p114
      %p116 = scmp.ne.s32.totalorder %s108, %s111
      %p117 = scmp.eq.s32.totalorder %s23, 0
      %p118 = por %p116, %p117
      %p119 = scmp.ne.s32.totalorder %s108, %s111
      %p120 = scmp.eq.s32.totalorder %s28, 2
      %p121 = por %p119, %p120
      %p122 = scmp.ne.s32.totalorder %s111, %s112
      %p123 = scmp.eq.s32.totalorder %s28, 0
      %p124 = por %p122, %p123
      %p125 = scmp.ne.s32.totalorder %s111, %s112
      %p126 = scmp.eq.s32.totalorder %s29, 2
      %p127 = por %p125, %p126
      %p129 = scmp.ne.s32.totalorder %s112, %s128
      %p130 = scmp.eq.s32.totalorder %s29, 0
      %p131 = por %p129, %p130
      %s133 = sadd.s32 %s132, 1
      %p136 = scmp.eq.s32.totalorder %s23, 2
      %p137 = scmp.ne.s32.totalorder %s132, %s134
      %p138 = scmp.eq.s32.totalorder %s23, 0
      %p139 = por %p137, %p138
      %p140 = scmp.ne.s32.totalorder %s132, %s134
      %p141 = scmp.eq.s32.totalorder %s28, 2
      %p142 = por %p140, %p141
      %p143 = scmp.ne.s32.totalorder %s134, %s135
      %p144 = scmp.eq.s32.totalorder %s28, 0
      %p145 = por %p143, %p144
      %p146 = scmp.ne.s32.totalorder %s134, %s135
      %p147 = scmp.eq.s32.totalorder %s29, 2
      %p148 = por %p146, %p147
      %p150 = scmp.ne.s32.totalorder %s135, %s149
      %p151 = scmp.eq.s32.totalorder %s29, 0
      %p152 = por %p150, %p151
      %s153 = ssub.s32 %s30, %s49
      %s154 = ssub.s32 %s31, %s45
      %s155 = sor.u32 %s153, %s154
      %p156 = scmp.eq.s32.totalorder %s155, 0
      %s158 = sadd.s32 %s157, 1
      %s159 = scalar_select %p156, %s157, %s158
      %p162 = pneg %p156
      %p163 = scmp.eq.s32.totalorder %s23, 2
      %p164 = por %p162, %p163
      %p165 = scmp.ne.s32.totalorder %s157, %s160
      %p166 = scmp.eq.s32.totalorder %s23, 0
      %p167 = por %p165, %p166
      %p168 = scmp.ne.s32.totalorder %s157, %s160
      %p169 = scmp.eq.s32.totalorder %s28, 2
      %p170 = por %p168, %p169
      %p171 = scmp.ne.s32.totalorder %s160, %s161
      %p172 = scmp.eq.s32.totalorder %s28, 0
      %p173 = por %p171, %p172
      %p174 = scmp.ne.s32.totalorder %s160, %s161
      %p175 = scmp.eq.s32.totalorder %s29, 2
      %p176 = por %p174, %p175
      %p178 = scmp.ne.s32.totalorder %s161, %s177
      %p179 = scmp.eq.s32.totalorder %s29, 0
      %p180 = por %p178, %p179
      %p181 = scmp.le.s32.totalorder 1, %s23
      %p182 = scmp.lt.s32.totalorder %s23, 4
      %p183 = pnand %p181, %p182
      %p184 = pneg %p183
      // Predicated region
      $region9: #{tpu_custom_call.1} parent=5 // pred_check
        _
      $region10: #{tpu_custom_call.1} parent=5 // pred_check_branch
        %186 = sbr.rel (%p183) target = $region12
      $region11: #{tpu_custom_call.1} parent=5 // pred_region
        %s187 = ssub.s32 %s23, 1
        // Predicated region
        $region13: #{tpu_custom_call.1} parent=11 // pred_check
          %p188 = pneg %p145
        $region14: #{tpu_custom_call.1} parent=11 // pred_check_branch
          %190 = sbr.rel (%p188) target = $region16
        $region15: #{tpu_custom_call.1} parent=11 // pred_region
          _
        $region16: #{tpu_custom_call.1} parent=11 // pred_fallthru
          _
      $region12: #{tpu_custom_call.1} parent=5 // pred_fallthru
        _
      %p191 = scmp.lt.s32.totalorder %s23, 3
      // Predicated region
      $region17: #{tpu_custom_call.1} parent=5 // pred_check
        %p192 = pneg %p191
      $region18: #{tpu_custom_call.1} parent=5 // pred_check_branch
        %194 = sbr.rel (%p192) target = $region20
      $region19: #{tpu_custom_call.1} parent=5 // pred_region
        // Predicated region
        $region21: #{tpu_custom_call.1} parent=19 // pred_check
          %p195 = pneg %p78
        $region22: #{tpu_custom_call.1} parent=19 // pred_check_branch
          %197 = sbr.rel (%p195) target = $region24
        $region23: #{tpu_custom_call.1} parent=19 // pred_region
          %s198 = sand.u32 %s68, 1
          %s199 = scalar_lea.sflag [#allocation6], %s198
          %s200 = sand.u32 %s68, 1
          %s201 = smul.addr %s200, 8
          %s202 = scalar_lea.vmem [#allocation5], %s201
          %s203 = sld [smem:[#allocation4 + %s30]]
          %s204 = ssub.s32 %s203, 1
          %p205 = scmp.gt.s32.totalorder %s204, 0
          %s206 = scalar_select %p205, %s204, 0
          %p207 = scmp.lt.s32.totalorder %s32, %s206
          %s208 = scalar_select %p207, %s32, %s206
          %s209 = smul.u32 2, %s31
          %s211 = ssub.s32 128, 128
          %212 = vsyncadd %s199, %s211
          %s213 = sadd.s32 %s208, %s209
          %s214 = smul.addr %s30, 2
          %s215 = sadd.s32 %s213, %s214
          %s216 = smul.addr %s215, 64
          %s217 = scalar_lea.hbm %s1, %s216
          %s218 = sshll.u32 %s202, 4
          %s219 = int_to_ptr.vmem [resolvable:$true] %s218
          %224 = dma.hbm_to_vmem [thread:$0]  %s217, 128, %s219, %s199, 64, 64, 4
        $region24: #{tpu_custom_call.1} parent=19 // pred_fallthru
          _
        // Predicated region
        $region25: #{tpu_custom_call.1} parent=19 // pred_check
          %p225 = pneg %p118
        $region26: #{tpu_custom_call.1} parent=19 // pred_check_branch
          %227 = sbr.rel (%p225) target = $region28
        $region27: #{tpu_custom_call.1} parent=19 // pred_region
          %s228 = sand.u32 %s108, 1
          %s229 = scalar_lea.sflag [#allocation9], %s228
          %s230 = sand.u32 %s108, 1
          %s231 = smul.addr %s230, 64
          %s232 = scalar_lea.vmem [#allocation8], %s231
          %s233 = sld [smem:[#allocation4 + %s30]]
          %s234 = ssub.s32 %s233, 1
          %p235 = scmp.gt.s32.totalorder %s234, 0
          %s236 = scalar_select %p235, %s234, 0
          %p237 = scmp.lt.s32.totalorder %s32, %s236
          %s238 = scalar_select %p237, %s32, %s236
          %s239 = smul.u32 16, %s238
          %s241 = ssub.s32 1024, 1024
          %242 = vsyncadd %s229, %s241
          %s243 = smul.addr %s30, 16
          %s244 = sadd.s32 %s239, %s243
          %s245 = smul.addr %s244, 64
          %s246 = scalar_lea.hbm %s2, %s245
          %s247 = sshll.u32 %s232, 4
          %s248 = int_to_ptr.vmem [resolvable:$true] %s247
          %253 = dma.hbm_to_vmem [thread:$0]  %s246, 1024, %s248, %s229, 64, 64, 4
        $region28: #{tpu_custom_call.1} parent=19 // pred_fallthru
          _
      $region20: #{tpu_custom_call.1} parent=5 // pred_fallthru
        _
      %p254 = scmp.le.s32.totalorder 1, %s23
      %p255 = scmp.lt.s32.totalorder %s23, 4
      %p256 = pnand %p254, %p255
      %p257 = pneg %p256
      // Predicated region
      $region29: #{tpu_custom_call.1} parent=5 // pred_check
        _
      $region30: #{tpu_custom_call.1} parent=5 // pred_check_branch
        %259 = sbr.rel (%p256) target = $region32
      $region31: #{tpu_custom_call.1} parent=5 // pred_region
        %s260 = ssub.s32 %s23, 1
        %s261 = sand.u32 %s71, 1
        %s262 = scalar_lea.sflag [#allocation6], %s261
        %s263 = sand.u32 %s71, 1
        %s264 = smul.addr %s263, 8
        %s265 = scalar_lea.vmem [#allocation5], %s264
        // Predicated region
        $region33: #{tpu_custom_call.1} parent=31 // pred_check
          %p266 = pneg %p84
        $region34: #{tpu_custom_call.1} parent=31 // pred_check_branch
          %268 = sbr.rel (%p266) target = $region36
        $region35: #{tpu_custom_call.1} parent=31 // pred_region
          %269 = dma.done %s262, 128
        $region36: #{tpu_custom_call.1} parent=31 // pred_fallthru
          _
        %s270 = sand.u32 %s111, 1
        %s271 = scalar_lea.sflag [#allocation9], %s270
        %s272 = sand.u32 %s111, 1
        %s273 = smul.addr %s272, 64
        %s274 = scalar_lea.vmem [#allocation8], %s273
        // Predicated region
        $region37: #{tpu_custom_call.1} parent=31 // pred_check
          %p275 = pneg %p124
        $region38: #{tpu_custom_call.1} parent=31 // pred_check_branch
          %277 = sbr.rel (%p275) target = $region40
        $region39: #{tpu_custom_call.1} parent=31 // pred_region
          %278 = dma.done %s271, 1024
        $region40: #{tpu_custom_call.1} parent=31 // pred_fallthru
          _
        %s279 = sand.u32 %s71, 1
        %s280 = scalar_lea.sflag [#allocation6], %s279
        %s281 = sand.u32 %s71, 1
        %s282 = smul.addr %s281, 8
        %s283 = scalar_lea.vmem [#allocation5], %s282
        %p284 = pneg %p84
        %p285 = pneg %p81
        %s286 = sand.u32 %s111, 1
        %s287 = scalar_lea.sflag [#allocation9], %s286
        %s288 = sand.u32 %s111, 1
        %s289 = smul.addr %s288, 64
        %s290 = scalar_lea.vmem [#allocation8], %s289
        %p291 = pneg %p124
        %p292 = pneg %p121
        %p293 = pneg %p145
        %p294 = pneg %p142
        %p295 = pneg %p173
        %p296 = pneg %p170
        %s297 = sand.u32 %s160, 1
        %s298 = scalar_lea.sflag [#allocation7], %s297
        %s299 = sand.u32 %s160, 1
        %s300 = smul.addr %s299, 8
        %s301 = scalar_lea.vmem [#allocation10], %s300
        %s302 = sld [smem:[#allocation4 + %s33]]
        %s303 = ssub.s32 %s302, 1
        %p304 = scmp.gt.s32.totalorder %s303, 0
        %s305 = scalar_select %p304, %s303, 0
        %p306 = scmp.lt.s32.totalorder %s35, %s305
        %s307 = scalar_select %p306, %s35, %s305
        %s308 = smul.u32 2, %s34
        %s309 = sld [smem:[#allocation4 + %s33]]
        %s310 = ssub.s32 %s309, 1
        %p311 = scmp.gt.s32.totalorder %s310, 0
        %s312 = scalar_select %p311, %s310, 0
        %p313 = scmp.lt.s32.totalorder %s35, %s312
        %s314 = scalar_select %p313, %s35, %s312
        %s315 = smul.u32 16, %s314
        %s316 = smul.u32 2, %s34
        %p318 = scmp.eq.s32.totalorder %s35, 0
        // Predicated region
        $region41: #{tpu_custom_call.1} parent=31 // pred_check
          %p319 = pneg %p318
        $region42: #{tpu_custom_call.1} parent=31 // pred_check_branch
          %321 = sbr.rel (%p319) target = $region44
        $region43: #{tpu_custom_call.1} parent=31 // pred_region
          %322 = vst [vmem:[#allocation2] sm:$0xff] 0.0
          %323 = vst [vmem:[#allocation2 + $0x8] sm:$0xff] 0.0
        $region44: #{tpu_custom_call.1} parent=31 // pred_fallthru
          _
        %s324 = sld [smem:[#allocation4 + %s33]]
        %p325 = scmp.lt.s32.totalorder %s35, %s324
        // Predicated region
        $region45: #{tpu_custom_call.1} parent=31 // pred_check
          %p326 = pneg %p325
        $region46: #{tpu_custom_call.1} parent=31 // pred_check_branch
          %328 = sbr.rel (%p326) target = $region48
        $region47: #{tpu_custom_call.1} parent=31 // pred_region
          %v329 = vld [vmem:[#allocation2] sm:$0xff]
          %v330 = vld [vmem:[#allocation2 + $0x8] sm:$0xff]
          %v331 = vld [vmem:[%s265] sm:$0xf]
          %v332 = vld [vmem:[%s265 + $0x4] sm:$0xf]
          %v333 = vld [vmem:[%s274] sm:$0xf]
          %v334 = vld [vmem:[%s274 + $0x4] sm:$0xf]
          %v335 = vld [vmem:[%s274 + $0x8] sm:$0xf]
          %v336 = vld [vmem:[%s274 + $0xc] sm:$0xf]
          %v337 = vld [vmem:[%s274 + $0x10] sm:$0xf]
          %v338 = vld [vmem:[%s274 + $0x14] sm:$0xf]
          %v339 = vld [vmem:[%s274 + $0x18] sm:$0xf]
          %v340 = vld [vmem:[%s274 + $0x1c] sm:$0xf]
          %v341 = vld [vmem:[%s274 + $0x20] sm:$0xf]
          %v342 = vld [vmem:[%s274 + $0x24] sm:$0xf]
          %v343 = vld [vmem:[%s274 + $0x28] sm:$0xf]
          %v344 = vld [vmem:[%s274 + $0x2c] sm:$0xf]
          %v345 = vld [vmem:[%s274 + $0x30] sm:$0xf]
          %v346 = vld [vmem:[%s274 + $0x34] sm:$0xf]
          %v347 = vld [vmem:[%s274 + $0x38] sm:$0xf]
          %v348 = vld [vmem:[%s274 + $0x3c] sm:$0xf]
          %v351 = vunpack.c.l.b16 %v331
          %v352 = vunpack.c.l.b16 %v332
          %v353 = vpack.c.b16 %v352, %v351
          %v371 = vunpack.c.l.b16 %v333
          %v372 = vunpack.c.l.b16 %v334
          %v373 = vunpack.c.l.b16 %v335
          %v374 = vunpack.c.l.b16 %v336
          %v375 = vunpack.c.l.b16 %v337
          %v376 = vunpack.c.l.b16 %v338
          %v377 = vunpack.c.l.b16 %v339
          %v378 = vunpack.c.l.b16 %v340
          %v379 = vunpack.c.l.b16 %v341
          %v380 = vunpack.c.l.b16 %v342
          %v381 = vunpack.c.l.b16 %v343
          %v382 = vunpack.c.l.b16 %v344
          %v383 = vunpack.c.l.b16 %v345
          %v384 = vunpack.c.l.b16 %v346
          %v385 = vunpack.c.l.b16 %v347
          %v386 = vunpack.c.l.b16 %v348
          %v387 = vpack.c.b16 %v372, %v371
          %v388 = vpack.c.b16 %v374, %v373
          %v389 = vpack.c.b16 %v376, %v375
          %v390 = vpack.c.b16 %v378, %v377
          %v391 = vpack.c.b16 %v380, %v379
          %v392 = vpack.c.b16 %v382, %v381
          %v393 = vpack.c.b16 %v384, %v383
          %v394 = vpack.c.b16 %v386, %v385
          %403 = vmatprep.subr.bf16.mxu0 0
          %404 = vmatpush1.bf16.msra.mxu0 %v387
          %405 = vmatprep.subr.bf16.mxu0 0
          %406 = vmatpush1.bf16.msra.mxu0 %v388
          %407 = vmatprep.subr.bf16.mxu0 0
          %408 = vmatpush1.bf16.msra.mxu0 %v389
          %409 = vmatprep.subr.bf16.mxu0 0
          %410 = vmatpush1.bf16.msra.mxu0 %v390
          %411 = vmatprep.subr.bf16.mxu0 0
          %412 = vmatpush1.bf16.msra.mxu0 %v391
          %413 = vmatprep.subr.bf16.mxu0 0
          %414 = vmatpush1.bf16.msra.mxu0 %v392
          %415 = vmatprep.subr.bf16.mxu0 0
          %416 = vmatpush1.bf16.msra.mxu0 %v393
          %417 = vmatprep.subr.bf16.mxu0 0
          %418 = vmatpush1.bf16.msra.mxu0 %v394
          %419 = vmatprep.subr.bf16.mxu0 0
          %420 = vmatpush1.bf16.msra.mxu0 0
          %421 = vmatprep.subr.bf16.mxu0 0
          %422 = vmatpush1.bf16.msra.mxu0 0
          %423 = vmatprep.subr.bf16.mxu0 0
          %424 = vmatpush1.bf16.msra.mxu0 0
          %425 = vmatprep.subr.bf16.mxu0 0
          %426 = vmatpush1.bf16.msra.mxu0 0
          %427 = vmatprep.subr.bf16.mxu0 0
          %428 = vmatpush1.bf16.msra.mxu0 0
          %429 = vmatprep.subr.bf16.mxu0 0
          %430 = vmatpush1.bf16.msra.mxu0 0
          %431 = vmatprep.subr.bf16.mxu0 0
          %432 = vmatpush1.bf16.msra.mxu0 0
          %433 = vmatprep.subr.bf16.mxu0 0
          %434 = vmatpush1.bf16.msra.mxu0 0
          %435 = vmatprep.mubr.bf16.mxu0 0
          %436 = vmatmul.mubr.bf16.gmra.mrb[0].mxu0 %v353
          %v437 = vpop.f32.mrb[0].mxu0
          %v438 = vadd.f32 0.0, %v437
          %v439 = vpop.f32.mrb[0].mxu0
          %v440 = vpop.f32.mrb[0].mxu0
          %v441 = vadd.f32 0.0, %v440
          %v442 = vpop.f32.mrb[0].mxu0
          %443 = vdwg.mxu0
          %v444 = vadd.f32 %v329, %v438
          %v445 = vadd.f32 %v330, %v441
          %446 = vst [vmem:[#allocation2] sm:$0xff] %v444
          %447 = vst [vmem:[#allocation2 + $0x8] sm:$0xff] %v445
        $region48: #{tpu_custom_call.1} parent=31 // pred_fallthru
          _
        // Predicated region
        $region49: #{tpu_custom_call.1} parent=31 // pred_check
          %p448 = pneg %p318
        $region50: #{tpu_custom_call.1} parent=31 // pred_check_branch
          %450 = sbr.rel (%p448) target = $region52
        $region51: #{tpu_custom_call.1} parent=31 // pred_region
          %v451 = vld [vmem:[#allocation2] sm:$0xff]
          %v452 = vld [vmem:[#allocation2 + $0x8] sm:$0xff]
          %v453 = vld [vmem:[%s3] sm:$0x1]
          %v455 = vlaneseq
          %v456 = vshrl.u32 %v455, 7
          %v457 = vsub.s32 0, %v456
          %v458 = vrot.slane %v453, %v457
          %v460 = vadd.f32 %v451, %v458
          %v461 = vadd.f32 %v452, %v458
          %v462 = vmax.f32 %v460, 0.0
          %v463 = vmax.f32 %v461, 0.0
          %v464 = vpack.c.bf16 %v463, %v462
          %v466 = vunpack.c.l.b16 %v464
          %v467 = vunpack.c.h.b16 %v464
          %v468 = vpack.c.b16 %v466, %v466
          %v469 = vpack.c.b16 %v467, %v467
          %472 = vst [vmem:[%s301] sm:$0xf] %v468
          %473 = vst [vmem:[%s301 + $0x4] sm:$0xf] %v469
        $region52: #{tpu_custom_call.1} parent=31 // pred_fallthru
          _
        %s474 = sand.u32 %s160, 1
        %s475 = scalar_lea.sflag [#allocation7], %s474
        %s476 = sand.u32 %s160, 1
        %s477 = smul.addr %s476, 8
        %s478 = scalar_lea.vmem [#allocation10], %s477
        // Predicated region
        $region53: #{tpu_custom_call.1} parent=31 // pred_check
          %p479 = pneg %p170
        $region54: #{tpu_custom_call.1} parent=31 // pred_check_branch
          %481 = sbr.rel (%p479) target = $region56
        $region55: #{tpu_custom_call.1} parent=31 // pred_region
          %s482 = smul.u32 2, %s34
          %s484 = ssub.s32 128, 128
          %485 = vsyncadd %s475, %s484
          %s486 = smul.addr %s33, 2
          %s487 = sadd.s32 %s482, %s486
          %s488 = smul.addr %s487, 64
          %s489 = scalar_lea.hbm %s4, %s488
          %s490 = sshll.u32 %s478, 4
          %s491 = int_to_ptr.vmem [resolvable:$true] %s490
          %496 = dma.vmem_to_hbm [thread:$0]  %s491, 128, %s489, %s475, 64, 64, 4
        $region56: #{tpu_custom_call.1} parent=31 // pred_fallthru
          _
      $region32: #{tpu_custom_call.1} parent=5 // pred_fallthru
        _
      %p497 = scmp.le.s32.totalorder 2, %s23
      // Predicated region
      $region57: #{tpu_custom_call.1} parent=5 // pred_check
        %p498 = pneg %p497
      $region58: #{tpu_custom_call.1} parent=5 // pred_check_branch
        %500 = sbr.rel (%p498) target = $region60
      $region59: #{tpu_custom_call.1} parent=5 // pred_region
        %s501 = ssub.s32 %s23, 2
        // Predicated region
        $region61: #{tpu_custom_call.1} parent=59 // pred_check
          %p502 = pneg %p176
        $region62: #{tpu_custom_call.1} parent=59 // pred_check_branch
          %504 = sbr.rel (%p502) target = $region64
        $region63: #{tpu_custom_call.1} parent=59 // pred_region
          %s505 = sand.u32 %s161, 1
          %s506 = scalar_lea.sflag [#allocation7], %s505
          %s507 = sand.u32 %s161, 1
          %s508 = smul.addr %s507, 8
          %s509 = scalar_lea.vmem [#allocation10], %s508
          %510 = dma.done %s506, 128
        $region64: #{tpu_custom_call.1} parent=59 // pred_fallthru
          _
      $region60: #{tpu_custom_call.1} parent=5 // pred_fallthru
        _
    $region6: #{tpu_custom_call.1} parent=1 // loop_footer
      %s27 = sadd.s32 1, %s23
    $region7: #{tpu_custom_call.1} parent=1 // loop_footer_branch
      %22 = sbr.rel target = $region3
    $region8: #{tpu_custom_call.1} parent=1 // loop_exit
      _
    %511 = vsyncpa [#allocation6], 1
    %s512 = scalar_lea.sflag [#allocation6], 1
    %513 = vsyncpa %s512, 1
    %514 = vsyncpa [#allocation9], 1
    %s515 = scalar_lea.sflag [#allocation9], 1
    %516 = vsyncpa %s515, 1
    %517 = vsyncpa [#allocation7], 1
    %s518 = scalar_lea.sflag [#allocation7], 1
    %519 = vsyncpa %s518, 1

</llo_original>
